<compile_context>
chip_gen: v7x
topology: tpu7x:2x2x1
jax: 0.10.0
libtpu: 0.0.40
codegen_flags: <defaults>
</compile_context>

<pallas_src>
import jax
import jax.numpy as jnp
from jax.experimental import pallas as pl
from jax.experimental.pallas import tpu as pltpu


def _round_up(n, m):
    return ((n + m - 1) // m) * m


def _autoencoder_kernel(x_ref,       # (T, TB, I)   timestep-major input tile, f32
                        wih_ref,     # (I, Gp)      LSTM input->gates, bf16
                        whh_ref,     # (H, Gp)      LSTM hidden->gates, bf16
                        b_ref,       # (1, Gp)      combined b_ih + b_hh, f32
                        wdec1_ref,   # (H, D1p)     folded (w_lat @ w_d1), bf16
                        bdec1_ref,   # (1, D1p)     folded (b_lat @ w_d1 + b_d1), f32
                        wd2_ref,     # (D1p, Op)    decoder layer 2, bf16
                        bd2_ref,     # (1, Op)      f32
                        out_ref):    # (TB, Op)     f32
    T, TB, I = x_ref.shape
    H, Gp = whh_ref.shape

    # ---- hoisted input projection: one (T*TB, I) x (I, Gp) bf16 matmul ----
    x_all = x_ref[...].reshape(T * TB, I).astype(jnp.bfloat16)
    gx = (jnp.dot(x_all, wih_ref[...], preferred_element_type=jnp.float32)
          + b_ref[...])                                   # (T*TB, Gp) f32
    gx = gx.reshape(T, TB, Gp)                            # timestep-major

    h = jnp.zeros((TB, H), jnp.float32)                   # PyTorch default h0 = 0
    c = jnp.zeros((TB, H), jnp.float32)                   # PyTorch default c0 = 0

    # ---- fully-unrolled LSTM recurrence (T small & static) ----
    # Only the small (TB,H)x(H,Gp) hidden matmul stays on the serial path.
    for t in range(T):
        gates = gx[t] + jnp.dot(h.astype(jnp.bfloat16), whh_ref[...],
                                preferred_element_type=jnp.float32)  # (TB, Gp)
        sig = jax.nn.sigmoid(gates)                       # one pass over the slab
        # PyTorch gate order: input, forget, cell(g), output
        i_g = sig[:, 0 * H:1 * H]
        f_g = sig[:, 1 * H:2 * H]
        g_g = jnp.tanh(gates[:, 2 * H:3 * H])
        o_g = sig[:, 3 * H:4 * H]
        c = f_g * c + i_g * g_g
        h = o_g * jnp.tanh(c)

    # ---- decoder MLP (latent linear already folded into layer 1) ----
    hid = jnp.maximum(
        jnp.dot(h.astype(jnp.bfloat16), wdec1_ref[...],
                preferred_element_type=jnp.float32) + bdec1_ref[...], 0.0)
    out_ref[...] = (jnp.dot(hid.astype(jnp.bfloat16), wd2_ref[...],
                            preferred_element_type=jnp.float32)
                    + bd2_ref[...])                       # lane-dense (TB, Op) store


@jax.jit
def autoencoder_forward(x, params):
    """x: (B, T, I) batch-first float32 (PyTorch convention). Returns (B, T, I)."""
    B, T, I = x.shape
    H = params["w_hh"].shape[0]
    D1 = params["w_d1"].shape[1]          # decoder hidden (128 in the module)
    O = I * T

    G = 4 * H
    Gp = _round_up(G, 128)                # gate slab width (128 for H=32)
    D1p = _round_up(D1, 128)
    Op = _round_up(O, 128)                # lane-dense output width

    # ---- batch padding / tiling: keep the matmul M dim a multiple of 8 ----
    if B <= 128:
        Bp = _round_up(B, 8)
        TB = Bp
    else:
        Bp = _round_up(B, 128)
        TB = 128
    grid = (Bp // TB,)

    f32, bf16 = jnp.float32, jnp.bfloat16
    x = x.astype(f32)
    # timestep-major + batch pad (padded rows are computed then sliced off)
    x_tm = jnp.transpose(x, (1, 0, 2))                                  # (T, B, I)
    x_tm = jnp.pad(x_tm, ((0, 0), (0, Bp - B), (0, 0)))                 # (T, Bp, I)

    # ---- parameters: pad trailing gate / output columns, cast matmul RHS to bf16 ----
    w_ih_p = jnp.pad(params["w_ih"].astype(f32), ((0, 0), (0, Gp - G))).astype(bf16)
    w_hh_p = jnp.pad(params["w_hh"].astype(f32), ((0, 0), (0, Gp - G))).astype(bf16)
    b_p = jnp.pad(params["b_lstm"].astype(f32), ((0, 0), (0, Gp - G)))  # (1, Gp) f32

    # fold latent linear into decoder layer 1 (exact: no nonlinearity between them)
    w_dec1 = params["w_lat"].astype(f32) @ params["w_d1"].astype(f32)           # (H, D1)
    b_dec1 = params["b_lat"].astype(f32) @ params["w_d1"].astype(f32) \
        + params["b_d1"].astype(f32)                                            # (1, D1)
    w_dec1_p = jnp.pad(w_dec1, ((0, 0), (0, D1p - D1))).astype(bf16)            # (H, D1p)
    b_dec1_p = jnp.pad(b_dec1, ((0, 0), (0, D1p - D1)))                         # (1, D1p)
    w_d2_p = jnp.pad(params["w_d2"].astype(f32),
                     ((0, D1p - D1), (0, Op - O))).astype(bf16)                 # (D1p, Op)
    b_d2_p = jnp.pad(params["b_d2"].astype(f32), ((0, 0), (0, Op - O)))         # (1, Op)

    # ---- advisory cost estimate ----
    flops = (2 * Bp * T * I * Gp           # hoisted input projection
             + 2 * T * Bp * H * Gp         # recurrence h @ W_hh
             + 2 * Bp * H * D1p            # folded latent+decoder layer 1
             + 2 * Bp * D1p * Op)          # decoder layer 2
    transcendentals = T * Bp * (Gp + 2 * H)            # sigmoid slab + 2 tanh per step
    bytes_accessed = (4 * (x_tm.size + b_p.size + b_dec1_p.size + b_d2_p.size + Bp * Op)
                      + 2 * (w_ih_p.size + w_hh_p.size + w_dec1_p.size + w_d2_p.size))
    cost = pl.CostEstimate(flops=flops, transcendentals=transcendentals,
                           bytes_accessed=bytes_accessed)

    # TODO(synk): at realistic (B, T, I*T) sizes, additionally tile w_d2/out over
    # Op columns (512-1024 lanes/tile), keep weight index_maps constant, and set
    # vmem_limit_bytes explicitly (64 MiB VMEM on v7x vs 128 MiB on v5e/v6e).
    out_flat = pl.pallas_call(
        _autoencoder_kernel,
        out_shape=jax.ShapeDtypeStruct((Bp, Op), jnp.float32),
        grid=grid,
        in_specs=[
            pl.BlockSpec((T, TB, I), lambda b: (0, b, 0)),     # batch-tiled input
            pl.BlockSpec((I, Gp), lambda b: (0, 0)),           # weights: constant maps
            pl.BlockSpec((H, Gp), lambda b: (0, 0)),           #   -> stay VMEM-resident
            pl.BlockSpec((1, Gp), lambda b: (0, 0)),
            pl.BlockSpec((H, D1p), lambda b: (0, 0)),
            pl.BlockSpec((1, D1p), lambda b: (0, 0)),
            pl.BlockSpec((D1p, Op), lambda b: (0, 0)),
            pl.BlockSpec((1, Op), lambda b: (0, 0)),
        ],
        out_specs=pl.BlockSpec((TB, Op), lambda b: (b, 0)),
        compiler_params=pltpu.CompilerParams(
            dimension_semantics=("parallel",)),                # 2-TC split on v7x
        cost_estimate=cost,
    )(
        x_tm,
        w_ih_p, w_hh_p, b_p,
        w_dec1_p, b_dec1_p,
        w_d2_p, b_d2_p,
    )
    # matches: decoded.view(-1, sequence_length, x.size(2))
    return out_flat[:B, :O].reshape(B, T, I)


def init_params(key, input_size, hidden_size, latent_size, sequence_length):
    ks = jax.random.split(key, 10)
    s = 0.1
    f32 = jnp.float32
    return {
        # LSTM weights stored as (in, out) with PyTorch gate order (i, f, g, o)
        "w_ih": s * jax.random.normal(ks[0], (input_size, 4 * hidden_size), f32),
        "w_hh": s * jax.random.normal(ks[1], (hidden_size, 4 * hidden_size), f32),
        # combined bias b_ih + b_hh (PyTorch keeps two; sum is equivalent)
        "b_lstm": s * jax.random.normal(ks[2], (1, 4 * hidden_size), f32),
        "w_lat": s * jax.random.normal(ks[3], (hidden_size, latent_size), f32),
        "b_lat": s * jax.random.normal(ks[4], (1, latent_size), f32),
        "w_d1": s * jax.random.normal(ks[5], (latent_size, 128), f32),
        "b_d1": s * jax.random.normal(ks[6], (1, 128), f32),
        "w_d2": s * jax.random.normal(ks[7], (128, input_size * sequence_length), f32),
        "b_d2": s * jax.random.normal(ks[8], (1, input_size * sequence_length), f32),
    }


if __name__ == "__main__":
    # small config consistent with the module's forward
    BATCH = 2
    INPUT_SIZE = 4
    HIDDEN_SIZE = 32
    LATENT_SIZE = 16
    SEQ_LEN = 8
    # TODO(synk): num_lstm_layers > 1 not implemented (kernel assumes 1 layer).

    key = jax.random.PRNGKey(0)
    k_x, k_p = jax.random.split(key)

    x = jax.random.normal(k_x, (BATCH, SEQ_LEN, INPUT_SIZE), jnp.float32)
    params = init_params(k_p, INPUT_SIZE, HIDDEN_SIZE, LATENT_SIZE, SEQ_LEN)

    out = autoencoder_forward(x, params)
    out = jax.block_until_ready(out)
    assert out.shape == (BATCH, SEQ_LEN, INPUT_SIZE), out.shape
    print("KERNEL_OK")
</pallas_src>

<mosaic_0001>
module attributes {stable_mosaic.version = 11 : i64} {
  func.func @_autoencoder_kernel(%arg0: i32, %arg1: memref<8x8x4xf32, #tpu.memory_space<vmem>>, %arg2: memref<4x128xbf16, #tpu.memory_space<vmem>>, %arg3: memref<32x128xbf16, #tpu.memory_space<vmem>>, %arg4: memref<1x128xf32, #tpu.memory_space<vmem>>, %arg5: memref<32x128xbf16, #tpu.memory_space<vmem>>, %arg6: memref<1x128xf32, #tpu.memory_space<vmem>>, %arg7: memref<128x128xbf16, #tpu.memory_space<vmem>>, %arg8: memref<1x128xf32, #tpu.memory_space<vmem>>, %arg9: memref<8x128xf32, #tpu.memory_space<vmem>>) attributes {dimension_semantics = [#tpu.dimension_semantics<parallel>], iteration_bounds = array<i64: 1>, scalar_prefetch = 0 : i64, scratch_operands = 0 : i64, tpu.core_type = #tpu.core_type<tc>, window_params = [{transform_indices = @transform_0, window_bounds = array<i64: 8, 8, 4>}, {pipeline_mode = #tpu.pipeline_mode<synchronous>, transform_indices = @transform_1, window_bounds = array<i64: 4, 128>}, {pipeline_mode = #tpu.pipeline_mode<synchronous>, transform_indices = @transform_2, window_bounds = array<i64: 32, 128>}, {pipeline_mode = #tpu.pipeline_mode<synchronous>, transform_indices = @transform_3, window_bounds = array<i64: 1, 128>}, {pipeline_mode = #tpu.pipeline_mode<synchronous>, transform_indices = @transform_4, window_bounds = array<i64: 32, 128>}, {pipeline_mode = #tpu.pipeline_mode<synchronous>, transform_indices = @transform_5, window_bounds = array<i64: 1, 128>}, {pipeline_mode = #tpu.pipeline_mode<synchronous>, transform_indices = @transform_6, window_bounds = array<i64: 128, 128>}, {pipeline_mode = #tpu.pipeline_mode<synchronous>, transform_indices = @transform_7, window_bounds = array<i64: 1, 128>}, {transform_indices = @transform_8, window_bounds = array<i64: 8, 128>}]} {
    %c0 = arith.constant 0 : index
    %c0_0 = arith.constant 0 : index
    %c0_1 = arith.constant 0 : index
    %0 = vector.load %arg1[%c0, %c0_0, %c0_1] : memref<8x8x4xf32, #tpu.memory_space<vmem>>, vector<8x8x4xf32>
    %1 = vector.shape_cast %0 : vector<8x8x4xf32> to vector<64x4xf32>
    %2 = arith.truncf %1 : vector<64x4xf32> to vector<64x4xbf16>
    %c0_2 = arith.constant 0 : index
    %c0_3 = arith.constant 0 : index
    %3 = vector.load %arg2[%c0_2, %c0_3] : memref<4x128xbf16, #tpu.memory_space<vmem>>, vector<4x128xbf16>
    %cst = arith.constant dense<0.000000e+00> : vector<64x128xf32>
    %4 = tpu.matmul %2, %3, %cst {dimension_numbers = #tpu.dot_dimension_numbers<[1], [0], [0], [1], [0, 0, 1, 1], [], []>} : vector<64x4xbf16>, vector<4x128xbf16>, vector<64x128xf32> -> vector<64x128xf32>
    %c0_4 = arith.constant 0 : index
    %c0_5 = arith.constant 0 : index
    %5 = vector.load %arg4[%c0_4, %c0_5] : memref<1x128xf32, #tpu.memory_space<vmem>>, vector<1x128xf32>
    %6 = vector.broadcast %5 : vector<1x128xf32> to vector<64x128xf32>
    %7 = arith.addf %4, %6 : vector<64x128xf32>
    %8 = vector.shape_cast %7 : vector<64x128xf32> to vector<8x8x128xf32>
    %cst_6 = arith.constant 0.000000e+00 : f32
    %9 = vector.broadcast %cst_6 : f32 to vector<8x32xf32>
    %cst_7 = arith.constant 0.000000e+00 : f32
    %10 = vector.broadcast %cst_7 : f32 to vector<8x32xf32>
    %11 = vector.extract_strided_slice %8 {offsets = [0, 0, 0], sizes = [1, 8, 128], strides = [1, 1, 1]} : vector<8x8x128xf32> to vector<1x8x128xf32>
    %12 = vector.shape_cast %11 : vector<1x8x128xf32> to vector<8x128xf32>
    %13 = arith.truncf %9 : vector<8x32xf32> to vector<8x32xbf16>
    %c0_8 = arith.constant 0 : index
    %c0_9 = arith.constant 0 : index
    %14 = vector.load %arg3[%c0_8, %c0_9] : memref<32x128xbf16, #tpu.memory_space<vmem>>, vector<32x128xbf16>
    %cst_10 = arith.constant dense<0.000000e+00> : vector<8x128xf32>
    %15 = tpu.matmul %13, %14, %cst_10 {dimension_numbers = #tpu.dot_dimension_numbers<[1], [0], [0], [1], [0, 0, 1, 1], [], []>} : vector<8x32xbf16>, vector<32x128xbf16>, vector<8x128xf32> -> vector<8x128xf32>
    %16 = arith.addf %12, %15 : vector<8x128xf32>
    %17 = arith.negf %16 : vector<8x128xf32>
    %18 = math.exp %17 : vector<8x128xf32>
    %cst_11 = arith.constant 1.000000e+00 : f32
    %19 = vector.broadcast %cst_11 : f32 to vector<8x128xf32>
    %20 = arith.addf %19, %18 : vector<8x128xf32>
    %21 = arith.divf %19, %20 : vector<8x128xf32>
    %22 = vector.extract_strided_slice %21 {offsets = [0, 0], sizes = [8, 32], strides = [1, 1]} : vector<8x128xf32> to vector<8x32xf32>
    %23 = vector.extract_strided_slice %21 {offsets = [0, 32], sizes = [8, 32], strides = [1, 1]} : vector<8x128xf32> to vector<8x32xf32>
    %24 = vector.extract_strided_slice %16 {offsets = [0, 64], sizes = [8, 32], strides = [1, 1]} : vector<8x128xf32> to vector<8x32xf32>
    %25 = math.tanh %24 : vector<8x32xf32>
    %26 = vector.extract_strided_slice %21 {offsets = [0, 96], sizes = [8, 32], strides = [1, 1]} : vector<8x128xf32> to vector<8x32xf32>
    %27 = arith.mulf %23, %10 : vector<8x32xf32>
    %28 = arith.mulf %22, %25 : vector<8x32xf32>
    %29 = arith.addf %27, %28 : vector<8x32xf32>
    %30 = math.tanh %29 : vector<8x32xf32>
    %31 = arith.mulf %26, %30 : vector<8x32xf32>
    %32 = vector.extract_strided_slice %8 {offsets = [1, 0, 0], sizes = [1, 8, 128], strides = [1, 1, 1]} : vector<8x8x128xf32> to vector<1x8x128xf32>
    %33 = vector.shape_cast %32 : vector<1x8x128xf32> to vector<8x128xf32>
    %34 = arith.truncf %31 : vector<8x32xf32> to vector<8x32xbf16>
    %c0_12 = arith.constant 0 : index
    %c0_13 = arith.constant 0 : index
    %35 = vector.load %arg3[%c0_12, %c0_13] : memref<32x128xbf16, #tpu.memory_space<vmem>>, vector<32x128xbf16>
    %cst_14 = arith.constant dense<0.000000e+00> : vector<8x128xf32>
    %36 = tpu.matmul %34, %35, %cst_14 {dimension_numbers = #tpu.dot_dimension_numbers<[1], [0], [0], [1], [0, 0, 1, 1], [], []>} : vector<8x32xbf16>, vector<32x128xbf16>, vector<8x128xf32> -> vector<8x128xf32>
    %37 = arith.addf %33, %36 : vector<8x128xf32>
    %38 = arith.negf %37 : vector<8x128xf32>
    %39 = math.exp %38 : vector<8x128xf32>
    %cst_15 = arith.constant 1.000000e+00 : f32
    %40 = vector.broadcast %cst_15 : f32 to vector<8x128xf32>
    %41 = arith.addf %40, %39 : vector<8x128xf32>
    %42 = arith.divf %40, %41 : vector<8x128xf32>
    %43 = vector.extract_strided_slice %42 {offsets = [0, 0], sizes = [8, 32], strides = [1, 1]} : vector<8x128xf32> to vector<8x32xf32>
    %44 = vector.extract_strided_slice %42 {offsets = [0, 32], sizes = [8, 32], strides = [1, 1]} : vector<8x128xf32> to vector<8x32xf32>
    %45 = vector.extract_strided_slice %37 {offsets = [0, 64], sizes = [8, 32], strides = [1, 1]} : vector<8x128xf32> to vector<8x32xf32>
    %46 = math.tanh %45 : vector<8x32xf32>
    %47 = vector.extract_strided_slice %42 {offsets = [0, 96], sizes = [8, 32], strides = [1, 1]} : vector<8x128xf32> to vector<8x32xf32>
    %48 = arith.mulf %44, %29 : vector<8x32xf32>
    %49 = arith.mulf %43, %46 : vector<8x32xf32>
    %50 = arith.addf %48, %49 : vector<8x32xf32>
    %51 = math.tanh %50 : vector<8x32xf32>
    %52 = arith.mulf %47, %51 : vector<8x32xf32>
    %53 = vector.extract_strided_slice %8 {offsets = [2, 0, 0], sizes = [1, 8, 128], strides = [1, 1, 1]} : vector<8x8x128xf32> to vector<1x8x128xf32>
    %54 = vector.shape_cast %53 : vector<1x8x128xf32> to vector<8x128xf32>
    %55 = arith.truncf %52 : vector<8x32xf32> to vector<8x32xbf16>
    %c0_16 = arith.constant 0 : index
    %c0_17 = arith.constant 0 : index
    %56 = vector.load %arg3[%c0_16, %c0_17] : memref<32x128xbf16, #tpu.memory_space<vmem>>, vector<32x128xbf16>
    %cst_18 = arith.constant dense<0.000000e+00> : vector<8x128xf32>
    %57 = tpu.matmul %55, %56, %cst_18 {dimension_numbers = #tpu.dot_dimension_numbers<[1], [0], [0], [1], [0, 0, 1, 1], [], []>} : vector<8x32xbf16>, vector<32x128xbf16>, vector<8x128xf32> -> vector<8x128xf32>
    %58 = arith.addf %54, %57 : vector<8x128xf32>
    %59 = arith.negf %58 : vector<8x128xf32>
    %60 = math.exp %59 : vector<8x128xf32>
    %cst_19 = arith.constant 1.000000e+00 : f32
    %61 = vector.broadcast %cst_19 : f32 to vector<8x128xf32>
    %62 = arith.addf %61, %60 : vector<8x128xf32>
    %63 = arith.divf %61, %62 : vector<8x128xf32>
    %64 = vector.extract_strided_slice %63 {offsets = [0, 0], sizes = [8, 32], strides = [1, 1]} : vector<8x128xf32> to vector<8x32xf32>
    %65 = vector.extract_strided_slice %63 {offsets = [0, 32], sizes = [8, 32], strides = [1, 1]} : vector<8x128xf32> to vector<8x32xf32>
    %66 = vector.extract_strided_slice %58 {offsets = [0, 64], sizes = [8, 32], strides = [1, 1]} : vector<8x128xf32> to vector<8x32xf32>
    %67 = math.tanh %66 : vector<8x32xf32>
    %68 = vector.extract_strided_slice %63 {offsets = [0, 96], sizes = [8, 32], strides = [1, 1]} : vector<8x128xf32> to vector<8x32xf32>
    %69 = arith.mulf %65, %50 : vector<8x32xf32>
    %70 = arith.mulf %64, %67 : vector<8x32xf32>
    %71 = arith.addf %69, %70 : vector<8x32xf32>
    %72 = math.tanh %71 : vector<8x32xf32>
    %73 = arith.mulf %68, %72 : vector<8x32xf32>
    %74 = vector.extract_strided_slice %8 {offsets = [3, 0, 0], sizes = [1, 8, 128], strides = [1, 1, 1]} : vector<8x8x128xf32> to vector<1x8x128xf32>
    %75 = vector.shape_cast %74 : vector<1x8x128xf32> to vector<8x128xf32>
    %76 = arith.truncf %73 : vector<8x32xf32> to vector<8x32xbf16>
    %c0_20 = arith.constant 0 : index
    %c0_21 = arith.constant 0 : index
    %77 = vector.load %arg3[%c0_20, %c0_21] : memref<32x128xbf16, #tpu.memory_space<vmem>>, vector<32x128xbf16>
    %cst_22 = arith.constant dense<0.000000e+00> : vector<8x128xf32>
    %78 = tpu.matmul %76, %77, %cst_22 {dimension_numbers = #tpu.dot_dimension_numbers<[1], [0], [0], [1], [0, 0, 1, 1], [], []>} : vector<8x32xbf16>, vector<32x128xbf16>, vector<8x128xf32> -> vector<8x128xf32>
    %79 = arith.addf %75, %78 : vector<8x128xf32>
    %80 = arith.negf %79 : vector<8x128xf32>
    %81 = math.exp %80 : vector<8x128xf32>
    %cst_23 = arith.constant 1.000000e+00 : f32
    %82 = vector.broadcast %cst_23 : f32 to vector<8x128xf32>
    %83 = arith.addf %82, %81 : vector<8x128xf32>
    %84 = arith.divf %82, %83 : vector<8x128xf32>
    %85 = vector.extract_strided_slice %84 {offsets = [0, 0], sizes = [8, 32], strides = [1, 1]} : vector<8x128xf32> to vector<8x32xf32>
    %86 = vector.extract_strided_slice %84 {offsets = [0, 32], sizes = [8, 32], strides = [1, 1]} : vector<8x128xf32> to vector<8x32xf32>
    %87 = vector.extract_strided_slice %79 {offsets = [0, 64], sizes = [8, 32], strides = [1, 1]} : vector<8x128xf32> to vector<8x32xf32>
    %88 = math.tanh %87 : vector<8x32xf32>
    %89 = vector.extract_strided_slice %84 {offsets = [0, 96], sizes = [8, 32], strides = [1, 1]} : vector<8x128xf32> to vector<8x32xf32>
    %90 = arith.mulf %86, %71 : vector<8x32xf32>
    %91 = arith.mulf %85, %88 : vector<8x32xf32>
    %92 = arith.addf %90, %91 : vector<8x32xf32>
    %93 = math.tanh %92 : vector<8x32xf32>
    %94 = arith.mulf %89, %93 : vector<8x32xf32>
    %95 = vector.extract_strided_slice %8 {offsets = [4, 0, 0], sizes = [1, 8, 128], strides = [1, 1, 1]} : vector<8x8x128xf32> to vector<1x8x128xf32>
    %96 = vector.shape_cast %95 : vector<1x8x128xf32> to vector<8x128xf32>
    %97 = arith.truncf %94 : vector<8x32xf32> to vector<8x32xbf16>
    %c0_24 = arith.constant 0 : index
    %c0_25 = arith.constant 0 : index
    %98 = vector.load %arg3[%c0_24, %c0_25] : memref<32x128xbf16, #tpu.memory_space<vmem>>, vector<32x128xbf16>
    %cst_26 = arith.constant dense<0.000000e+00> : vector<8x128xf32>
    %99 = tpu.matmul %97, %98, %cst_26 {dimension_numbers = #tpu.dot_dimension_numbers<[1], [0], [0], [1], [0, 0, 1, 1], [], []>} : vector<8x32xbf16>, vector<32x128xbf16>, vector<8x128xf32> -> vector<8x128xf32>
    %100 = arith.addf %96, %99 : vector<8x128xf32>
    %101 = arith.negf %100 : vector<8x128xf32>
    %102 = math.exp %101 : vector<8x128xf32>
    %cst_27 = arith.constant 1.000000e+00 : f32
    %103 = vector.broadcast %cst_27 : f32 to vector<8x128xf32>
    %104 = arith.addf %103, %102 : vector<8x128xf32>
    %105 = arith.divf %103, %104 : vector<8x128xf32>
    %106 = vector.extract_strided_slice %105 {offsets = [0, 0], sizes = [8, 32], strides = [1, 1]} : vector<8x128xf32> to vector<8x32xf32>
    %107 = vector.extract_strided_slice %105 {offsets = [0, 32], sizes = [8, 32], strides = [1, 1]} : vector<8x128xf32> to vector<8x32xf32>
    %108 = vector.extract_strided_slice %100 {offsets = [0, 64], sizes = [8, 32], strides = [1, 1]} : vector<8x128xf32> to vector<8x32xf32>
    %109 = math.tanh %108 : vector<8x32xf32>
    %110 = vector.extract_strided_slice %105 {offsets = [0, 96], sizes = [8, 32], strides = [1, 1]} : vector<8x128xf32> to vector<8x32xf32>
    %111 = arith.mulf %107, %92 : vector<8x32xf32>
    %112 = arith.mulf %106, %109 : vector<8x32xf32>
    %113 = arith.addf %111, %112 : vector<8x32xf32>
    %114 = math.tanh %113 : vector<8x32xf32>
    %115 = arith.mulf %110, %114 : vector<8x32xf32>
    %116 = vector.extract_strided_slice %8 {offsets = [5, 0, 0], sizes = [1, 8, 128], strides = [1, 1, 1]} : vector<8x8x128xf32> to vector<1x8x128xf32>
    %117 = vector.shape_cast %116 : vector<1x8x128xf32> to vector<8x128xf32>
    %118 = arith.truncf %115 : vector<8x32xf32> to vector<8x32xbf16>
    %c0_28 = arith.constant 0 : index
    %c0_29 = arith.constant 0 : index
    %119 = vector.load %arg3[%c0_28, %c0_29] : memref<32x128xbf16, #tpu.memory_space<vmem>>, vector<32x128xbf16>
    %cst_30 = arith.constant dense<0.000000e+00> : vector<8x128xf32>
    %120 = tpu.matmul %118, %119, %cst_30 {dimension_numbers = #tpu.dot_dimension_numbers<[1], [0], [0], [1], [0, 0, 1, 1], [], []>} : vector<8x32xbf16>, vector<32x128xbf16>, vector<8x128xf32> -> vector<8x128xf32>
    %121 = arith.addf %117, %120 : vector<8x128xf32>
    %122 = arith.negf %121 : vector<8x128xf32>
    %123 = math.exp %122 : vector<8x128xf32>
    %cst_31 = arith.constant 1.000000e+00 : f32
    %124 = vector.broadcast %cst_31 : f32 to vector<8x128xf32>
    %125 = arith.addf %124, %123 : vector<8x128xf32>
    %126 = arith.divf %124, %125 : vector<8x128xf32>
    %127 = vector.extract_strided_slice %126 {offsets = [0, 0], sizes = [8, 32], strides = [1, 1]} : vector<8x128xf32> to vector<8x32xf32>
    %128 = vector.extract_strided_slice %126 {offsets = [0, 32], sizes = [8, 32], strides = [1, 1]} : vector<8x128xf32> to vector<8x32xf32>
    %129 = vector.extract_strided_slice %121 {offsets = [0, 64], sizes = [8, 32], strides = [1, 1]} : vector<8x128xf32> to vector<8x32xf32>
    %130 = math.tanh %129 : vector<8x32xf32>
    %131 = vector.extract_strided_slice %126 {offsets = [0, 96], sizes = [8, 32], strides = [1, 1]} : vector<8x128xf32> to vector<8x32xf32>
    %132 = arith.mulf %128, %113 : vector<8x32xf32>
    %133 = arith.mulf %127, %130 : vector<8x32xf32>
    %134 = arith.addf %132, %133 : vector<8x32xf32>
    %135 = math.tanh %134 : vector<8x32xf32>
    %136 = arith.mulf %131, %135 : vector<8x32xf32>
    %137 = vector.extract_strided_slice %8 {offsets = [6, 0, 0], sizes = [1, 8, 128], strides = [1, 1, 1]} : vector<8x8x128xf32> to vector<1x8x128xf32>
    %138 = vector.shape_cast %137 : vector<1x8x128xf32> to vector<8x128xf32>
    %139 = arith.truncf %136 : vector<8x32xf32> to vector<8x32xbf16>
    %c0_32 = arith.constant 0 : index
    %c0_33 = arith.constant 0 : index
    %140 = vector.load %arg3[%c0_32, %c0_33] : memref<32x128xbf16, #tpu.memory_space<vmem>>, vector<32x128xbf16>
    %cst_34 = arith.constant dense<0.000000e+00> : vector<8x128xf32>
    %141 = tpu.matmul %139, %140, %cst_34 {dimension_numbers = #tpu.dot_dimension_numbers<[1], [0], [0], [1], [0, 0, 1, 1], [], []>} : vector<8x32xbf16>, vector<32x128xbf16>, vector<8x128xf32> -> vector<8x128xf32>
    %142 = arith.addf %138, %141 : vector<8x128xf32>
    %143 = arith.negf %142 : vector<8x128xf32>
    %144 = math.exp %143 : vector<8x128xf32>
    %cst_35 = arith.constant 1.000000e+00 : f32
    %145 = vector.broadcast %cst_35 : f32 to vector<8x128xf32>
    %146 = arith.addf %145, %144 : vector<8x128xf32>
    %147 = arith.divf %145, %146 : vector<8x128xf32>
    %148 = vector.extract_strided_slice %147 {offsets = [0, 0], sizes = [8, 32], strides = [1, 1]} : vector<8x128xf32> to vector<8x32xf32>
    %149 = vector.extract_strided_slice %147 {offsets = [0, 32], sizes = [8, 32], strides = [1, 1]} : vector<8x128xf32> to vector<8x32xf32>
    %150 = vector.extract_strided_slice %142 {offsets = [0, 64], sizes = [8, 32], strides = [1, 1]} : vector<8x128xf32> to vector<8x32xf32>
    %151 = math.tanh %150 : vector<8x32xf32>
    %152 = vector.extract_strided_slice %147 {offsets = [0, 96], sizes = [8, 32], strides = [1, 1]} : vector<8x128xf32> to vector<8x32xf32>
    %153 = arith.mulf %149, %134 : vector<8x32xf32>
    %154 = arith.mulf %148, %151 : vector<8x32xf32>
    %155 = arith.addf %153, %154 : vector<8x32xf32>
    %156 = math.tanh %155 : vector<8x32xf32>
    %157 = arith.mulf %152, %156 : vector<8x32xf32>
    %158 = vector.extract_strided_slice %8 {offsets = [7, 0, 0], sizes = [1, 8, 128], strides = [1, 1, 1]} : vector<8x8x128xf32> to vector<1x8x128xf32>
    %159 = vector.shape_cast %158 : vector<1x8x128xf32> to vector<8x128xf32>
    %160 = arith.truncf %157 : vector<8x32xf32> to vector<8x32xbf16>
    %c0_36 = arith.constant 0 : index
    %c0_37 = arith.constant 0 : index
    %161 = vector.load %arg3[%c0_36, %c0_37] : memref<32x128xbf16, #tpu.memory_space<vmem>>, vector<32x128xbf16>
    %cst_38 = arith.constant dense<0.000000e+00> : vector<8x128xf32>
    %162 = tpu.matmul %160, %161, %cst_38 {dimension_numbers = #tpu.dot_dimension_numbers<[1], [0], [0], [1], [0, 0, 1, 1], [], []>} : vector<8x32xbf16>, vector<32x128xbf16>, vector<8x128xf32> -> vector<8x128xf32>
    %163 = arith.addf %159, %162 : vector<8x128xf32>
    %164 = arith.negf %163 : vector<8x128xf32>
    %165 = math.exp %164 : vector<8x128xf32>
    %cst_39 = arith.constant 1.000000e+00 : f32
    %166 = vector.broadcast %cst_39 : f32 to vector<8x128xf32>
    %167 = arith.addf %166, %165 : vector<8x128xf32>
    %168 = arith.divf %166, %167 : vector<8x128xf32>
    %169 = vector.extract_strided_slice %168 {offsets = [0, 0], sizes = [8, 32], strides = [1, 1]} : vector<8x128xf32> to vector<8x32xf32>
    %170 = vector.extract_strided_slice %168 {offsets = [0, 32], sizes = [8, 32], strides = [1, 1]} : vector<8x128xf32> to vector<8x32xf32>
    %171 = vector.extract_strided_slice %163 {offsets = [0, 64], sizes = [8, 32], strides = [1, 1]} : vector<8x128xf32> to vector<8x32xf32>
    %172 = math.tanh %171 : vector<8x32xf32>
    %173 = vector.extract_strided_slice %168 {offsets = [0, 96], sizes = [8, 32], strides = [1, 1]} : vector<8x128xf32> to vector<8x32xf32>
    %174 = arith.mulf %170, %155 : vector<8x32xf32>
    %175 = arith.mulf %169, %172 : vector<8x32xf32>
    %176 = arith.addf %174, %175 : vector<8x32xf32>
    %177 = math.tanh %176 : vector<8x32xf32>
    %178 = arith.mulf %173, %177 : vector<8x32xf32>
    %179 = arith.truncf %178 : vector<8x32xf32> to vector<8x32xbf16>
    %c0_40 = arith.constant 0 : index
    %c0_41 = arith.constant 0 : index
    %180 = vector.load %arg5[%c0_40, %c0_41] : memref<32x128xbf16, #tpu.memory_space<vmem>>, vector<32x128xbf16>
    %cst_42 = arith.constant dense<0.000000e+00> : vector<8x128xf32>
    %181 = tpu.matmul %179, %180, %cst_42 {dimension_numbers = #tpu.dot_dimension_numbers<[1], [0], [0], [1], [0, 0, 1, 1], [], []>} : vector<8x32xbf16>, vector<32x128xbf16>, vector<8x128xf32> -> vector<8x128xf32>
    %c0_43 = arith.constant 0 : index
    %c0_44 = arith.constant 0 : index
    %182 = vector.load %arg6[%c0_43, %c0_44] : memref<1x128xf32, #tpu.memory_space<vmem>>, vector<1x128xf32>
    %183 = vector.broadcast %182 : vector<1x128xf32> to vector<8x128xf32>
    %184 = arith.addf %181, %183 : vector<8x128xf32>
    %cst_45 = arith.constant 0.000000e+00 : f32
    %185 = vector.broadcast %cst_45 : f32 to vector<8x128xf32>
    %186 = arith.maximumf %184, %185 : vector<8x128xf32>
    %187 = arith.truncf %186 : vector<8x128xf32> to vector<8x128xbf16>
    %c0_46 = arith.constant 0 : index
    %c0_47 = arith.constant 0 : index
    %188 = vector.load %arg7[%c0_46, %c0_47] : memref<128x128xbf16, #tpu.memory_space<vmem>>, vector<128x128xbf16>
    %cst_48 = arith.constant dense<0.000000e+00> : vector<8x128xf32>
    %189 = tpu.matmul %187, %188, %cst_48 {dimension_numbers = #tpu.dot_dimension_numbers<[1], [0], [0], [1], [0, 0, 1, 1], [], []>} : vector<8x128xbf16>, vector<128x128xbf16>, vector<8x128xf32> -> vector<8x128xf32>
    %c0_49 = arith.constant 0 : index
    %c0_50 = arith.constant 0 : index
    %190 = vector.load %arg8[%c0_49, %c0_50] : memref<1x128xf32, #tpu.memory_space<vmem>>, vector<1x128xf32>
    %191 = vector.broadcast %190 : vector<1x128xf32> to vector<8x128xf32>
    %192 = arith.addf %189, %191 : vector<8x128xf32>
    %c0_51 = arith.constant 0 : index
    %c0_52 = arith.constant 0 : index
    %193 = vector.load %arg9[%c0_51, %c0_52] : memref<8x128xf32, #tpu.memory_space<vmem>>, vector<8x128xf32>
    tpu.vector_store %arg9[%c0_51, %c0_52], %192 {strides = array<i32>} : memref<8x128xf32, #tpu.memory_space<vmem>>, vector<8x128xf32>,
    return
  }
  func.func @transform_0(%arg0: i32) -> (i32, i32, i32) {
    %c0_i32 = arith.constant 0 : i32
    %c0_i32_0 = arith.constant 0 : i32
    %c0_i32_1 = arith.constant 0 : i32
    return %c0_i32, %arg0, %c0_i32_0 : i32, i32, i32
  }
  func.func @transform_1(%arg0: i32) -> (i32, i32) {
    %c0_i32 = arith.constant 0 : i32
    %c0_i32_0 = arith.constant 0 : i32
    %c0_i32_1 = arith.constant 0 : i32
    return %c0_i32, %c0_i32_0 : i32, i32
  }
  func.func @transform_2(%arg0: i32) -> (i32, i32) {
    %c0_i32 = arith.constant 0 : i32
    %c0_i32_0 = arith.constant 0 : i32
    %c0_i32_1 = arith.constant 0 : i32
    return %c0_i32, %c0_i32_0 : i32, i32
  }
  func.func @transform_3(%arg0: i32) -> (i32, i32) {
    %c0_i32 = arith.constant 0 : i32
    %c0_i32_0 = arith.constant 0 : i32
    %c0_i32_1 = arith.constant 0 : i32
    return %c0_i32, %c0_i32_0 : i32, i32
  }
  func.func @transform_4(%arg0: i32) -> (i32, i32) {
    %c0_i32 = arith.constant 0 : i32
    %c0_i32_0 = arith.constant 0 : i32
    %c0_i32_1 = arith.constant 0 : i32
    return %c0_i32, %c0_i32_0 : i32, i32
  }
  func.func @transform_5(%arg0: i32) -> (i32, i32) {
    %c0_i32 = arith.constant 0 : i32
    %c0_i32_0 = arith.constant 0 : i32
    %c0_i32_1 = arith.constant 0 : i32
    return %c0_i32, %c0_i32_0 : i32, i32
  }
  func.func @transform_6(%arg0: i32) -> (i32, i32) {
    %c0_i32 = arith.constant 0 : i32
    %c0_i32_0 = arith.constant 0 : i32
    %c0_i32_1 = arith.constant 0 : i32
    return %c0_i32, %c0_i32_0 : i32, i32
  }
  func.func @transform_7(%arg0: i32) -> (i32, i32) {
    %c0_i32 = arith.constant 0 : i32
    %c0_i32_0 = arith.constant 0 : i32
    %c0_i32_1 = arith.constant 0 : i32
    return %c0_i32, %c0_i32_0 : i32, i32
  }
  func.func @transform_8(%arg0: i32) -> (i32, i32) {
    %c0_i32 = arith.constant 0 : i32
    %c0_i32_0 = arith.constant 0 : i32
    return %arg0, %c0_i32 : i32, i32
  }
}

</mosaic_0001>

<llo_original>
// kernel: autoencoder_forward.1
$region0: #{autoencoder_forward.1}
  #allocation0 [shape = 'u32[]', space=smem, size = 0x4, offset = 0x4, fixed_abs, tag = 'smem constant byte address 0x4 - core index']
  #allocation1 [shape = 'u32[144,128]{1,0:T(1,128)}', space=vmem, size = 0x12000, scoped, tag = 'internal scratch']
  %s0 = inlined_call_operand.vmem [shape: f32[8,8,4], index: 0, kind: input, shape index: {}]
  %s1 = inlined_call_operand.vmem [shape: bf16[4,128], index: 1, kind: input, shape index: {}]
  %s2 = inlined_call_operand.vmem [shape: bf16[32,128], index: 2, kind: input, shape index: {}]
  %s3 = inlined_call_operand.vmem [shape: f32[1,128], index: 3, kind: input, shape index: {}]
  %s4 = inlined_call_operand.vmem [shape: bf16[32,128], index: 4, kind: input, shape index: {}]
  %s5 = inlined_call_operand.vmem [shape: f32[1,128], index: 5, kind: input, shape index: {}]
  %s6 = inlined_call_operand.vmem [shape: bf16[128,128], index: 6, kind: input, shape index: {}]
  %s7 = inlined_call_operand.vmem [shape: f32[1,128], index: 7, kind: input, shape index: {}]
  %s8 = inlined_call_operand.vmem [shape: f32[8,128], index: 8, kind: output, shape index: {}]
  %s9 = sld [smem:[#allocation0]]
  $region42: #{autoencoder_forward.1} parent=0
    _
  %s11 = ssub.s32 1, %s9
  %s12 = scalar_select 0, %s11, %s9
  // Predicated region
  $region2: #{autoencoder_forward.1} parent=0 // pred_check
    _
  $region3: #{autoencoder_forward.1} parent=0 // pred_check_branch
    %14 = sbr.rel (0) target = $region5
  $region4: #{autoencoder_forward.1} parent=0 // pred_region
    _
  $region5: #{autoencoder_forward.1} parent=0 // pred_fallthru
    _
  // Predicated region
  $region6: #{autoencoder_forward.1} parent=0 // pred_check
    _
  $region7: #{autoencoder_forward.1} parent=0 // pred_check_branch
    %16 = sbr.rel (0) target = $region9
  $region8: #{autoencoder_forward.1} parent=0 // pred_region
    _
  $region9: #{autoencoder_forward.1} parent=0 // pred_fallthru
    _
  // Predicated region
  $region10: #{autoencoder_forward.1} parent=0 // pred_check
    _
  $region11: #{autoencoder_forward.1} parent=0 // pred_check_branch
    %18 = sbr.rel (0) target = $region13
  $region12: #{autoencoder_forward.1} parent=0 // pred_region
    _
  $region13: #{autoencoder_forward.1} parent=0 // pred_fallthru
    _
  // Predicated region
  $region14: #{autoencoder_forward.1} parent=0 // pred_check
    _
  $region15: #{autoencoder_forward.1} parent=0 // pred_check_branch
    %20 = sbr.rel (0) target = $region17
  $region16: #{autoencoder_forward.1} parent=0 // pred_region
    _
  $region17: #{autoencoder_forward.1} parent=0 // pred_fallthru
    _
  // Predicated region
  $region18: #{autoencoder_forward.1} parent=0 // pred_check
    _
  $region19: #{autoencoder_forward.1} parent=0 // pred_check_branch
    %22 = sbr.rel (0) target = $region21
  $region20: #{autoencoder_forward.1} parent=0 // pred_region
    _
  $region21: #{autoencoder_forward.1} parent=0 // pred_fallthru
    _
  // Predicated region
  $region22: #{autoencoder_forward.1} parent=0 // pred_check
    _
  $region23: #{autoencoder_forward.1} parent=0 // pred_check_branch
    %24 = sbr.rel (0) target = $region25
  $region24: #{autoencoder_forward.1} parent=0 // pred_region
    _
  $region25: #{autoencoder_forward.1} parent=0 // pred_fallthru
    _
  // Predicated region
  $region26: #{autoencoder_forward.1} parent=0 // pred_check
    _
  $region27: #{autoencoder_forward.1} parent=0 // pred_check_branch
    %26 = sbr.rel (0) target = $region29
  $region28: #{autoencoder_forward.1} parent=0 // pred_region
    _
  $region29: #{autoencoder_forward.1} parent=0 // pred_fallthru
    _
  // Predicated region
  $region30: #{autoencoder_forward.1} parent=0 // pred_check
    _
  $region31: #{autoencoder_forward.1} parent=0 // pred_check_branch
    %28 = sbr.rel (0) target = $region33
  $region32: #{autoencoder_forward.1} parent=0 // pred_region
    _
  $region33: #{autoencoder_forward.1} parent=0 // pred_fallthru
    _
  %v30 = vld [vmem:[%s0] sm:$0xff]
  %v31 = vld [vmem:[%s0 + $0x8] sm:$0xff]
  %v32 = vld [vmem:[%s0 + $0x10] sm:$0xff]
  %v33 = vld [vmem:[%s0 + $0x18] sm:$0xff]
  %v34 = vld [vmem:[%s0 + $0x20] sm:$0xff]
  %v35 = vld [vmem:[%s0 + $0x28] sm:$0xff]
  %v36 = vld [vmem:[%s0 + $0x30] sm:$0xff]
  %v37 = vld [vmem:[%s0 + $0x38] sm:$0xff]
  %v38 = vpack.c.bf16 %v31, %v30
  %v39 = vpack.c.bf16 %v33, %v32
  %v40 = vpack.c.bf16 %v35, %v34
  %v41 = vpack.c.bf16 %v37, %v36
  %v42 = vld [vmem:[%s1] sm:$0x3]
  %v43 = vld [vmem:[%s3] sm:$0x1]
  %v45 = vlaneseq
  %v46 = vshrl.u32 %v45, 7
  %v47 = vsub.s32 0, %v46
  %v48 = vrot.slane %v43, %v47
  %vm50 = vcmask 31744
  %v52 = vsel %vm50, %v38, 0
  %v55 = vsel %vm50, %v39, 0
  %v58 = vsel %vm50, %v40, 0
  %v61 = vsel %vm50, %v41, 0
  %vm63 = vcmask 1041408
  %v65 = vsel %vm63, %v42, 0
  %67 = vmatprep.subr.bf16.mxu0 0
  %68 = vmatpush1.bf16.msra.mxu0 %v65
  %69 = vmatprep.subr.bf16.mxu0 0
  %70 = vmatpush1.bf16.msra.mxu0 0
  %71 = vmatprep.subr.bf16.mxu0 0
  %72 = vmatpush1.bf16.msra.mxu0 0
  %73 = vmatprep.subr.bf16.mxu0 0
  %74 = vmatpush1.bf16.msra.mxu0 0
  %75 = vmatprep.subr.bf16.mxu0 0
  %76 = vmatpush1.bf16.msra.mxu0 0
  %77 = vmatprep.subr.bf16.mxu0 0
  %78 = vmatpush1.bf16.msra.mxu0 0
  %79 = vmatprep.subr.bf16.mxu0 0
  %80 = vmatpush1.bf16.msra.mxu0 0
  %81 = vmatprep.subr.bf16.mxu0 0
  %82 = vmatpush1.bf16.msra.mxu0 0
  %83 = vmatprep.subr.bf16.mxu0 0
  %84 = vmatpush1.bf16.msra.mxu0 0
  %85 = vmatprep.subr.bf16.mxu0 0
  %86 = vmatpush1.bf16.msra.mxu0 0
  %87 = vmatprep.subr.bf16.mxu0 0
  %88 = vmatpush1.bf16.msra.mxu0 0
  %89 = vmatprep.subr.bf16.mxu0 0
  %90 = vmatpush1.bf16.msra.mxu0 0
  %91 = vmatprep.subr.bf16.mxu0 0
  %92 = vmatpush1.bf16.msra.mxu0 0
  %93 = vmatprep.subr.bf16.mxu0 0
  %94 = vmatpush1.bf16.msra.mxu0 0
  %95 = vmatprep.subr.bf16.mxu0 0
  %96 = vmatpush1.bf16.msra.mxu0 0
  %97 = vmatprep.subr.bf16.mxu0 0
  %98 = vmatpush1.bf16.msra.mxu0 0
  %99 = vmatprep.mubr.bf16.mxu0 0
  %100 = vmatmul.mubr.bf16.gmra.mrb[0].mxu0 %v52
  %v101 = vpop.f32.mrb[0].mxu0
  %v102 = vadd.f32 %v48, %v101
  %v103 = vpop.f32.mrb[0].mxu0
  %v104 = vpop.f32.mrb[0].mxu0
  %v105 = vadd.f32 %v48, %v104
  %v106 = vpop.f32.mrb[0].mxu0
  %107 = vmatprep.mubr.bf16.mxu0 0
  %108 = vmatmul.mubr.bf16.gmra.mrb[0].mxu0 %v55
  %v109 = vpop.f32.mrb[0].mxu0
  %v110 = vadd.f32 %v48, %v109
  %v111 = vpop.f32.mrb[0].mxu0
  %v112 = vpop.f32.mrb[0].mxu0
  %v113 = vadd.f32 %v48, %v112
  %v114 = vpop.f32.mrb[0].mxu0
  %115 = vmatprep.mubr.bf16.mxu0 0
  %116 = vmatmul.mubr.bf16.gmra.mrb[0].mxu0 %v58
  %v117 = vpop.f32.mrb[0].mxu0
  %v118 = vadd.f32 %v48, %v117
  %v119 = vpop.f32.mrb[0].mxu0
  %v120 = vpop.f32.mrb[0].mxu0
  %v121 = vadd.f32 %v48, %v120
  %v122 = vpop.f32.mrb[0].mxu0
  %123 = vmatprep.mubr.bf16.mxu0 0
  %124 = vmatmul.mubr.bf16.gmra.mrb[0].mxu0 %v61
  %v125 = vpop.f32.mrb[0].mxu0
  %v126 = vadd.f32 %v48, %v125
  %v127 = vpop.f32.mrb[0].mxu0
  %v128 = vpop.f32.mrb[0].mxu0
  %v129 = vadd.f32 %v48, %v128
  %v130 = vpop.f32.mrb[0].mxu0
  %131 = vdwg.mxu0
  %v132 = vld [vmem:[%s2] sm:$0xf]
  %v133 = vld [vmem:[%s2 + $0x4] sm:$0xf]
  %v134 = vld [vmem:[%s2 + $0x8] sm:$0xf]
  %v135 = vld [vmem:[%s2 + $0xc] sm:$0xf]
  %v140 = vunpack.c.l.b16 %v132
  %v141 = vunpack.c.l.b16 %v133
  %v142 = vunpack.c.l.b16 %v134
  %v143 = vunpack.c.l.b16 %v135
  %v144 = vpack.c.b16 %v141, %v140
  %v145 = vpack.c.b16 %v143, %v142
  %vm148 = vcmask 261120
  %v150 = vsel %vm148, 0, 0
  %152 = vmatprep.subr.bf16.mxu0 0
  %153 = vmatpush1.bf16.msra.mxu0 %v144
  %154 = vmatprep.subr.bf16.mxu0 0
  %155 = vmatpush1.bf16.msra.mxu0 %v145
  %156 = vmatprep.subr.bf16.mxu0 0
  %157 = vmatpush1.bf16.msra.mxu0 0
  %158 = vmatprep.subr.bf16.mxu0 0
  %159 = vmatpush1.bf16.msra.mxu0 0
  %160 = vmatprep.subr.bf16.mxu0 0
  %161 = vmatpush1.bf16.msra.mxu0 0
  %162 = vmatprep.subr.bf16.mxu0 0
  %163 = vmatpush1.bf16.msra.mxu0 0
  %164 = vmatprep.subr.bf16.mxu0 0
  %165 = vmatpush1.bf16.msra.mxu0 0
  %166 = vmatprep.subr.bf16.mxu0 0
  %167 = vmatpush1.bf16.msra.mxu0 0
  %168 = vmatprep.subr.bf16.mxu0 0
  %169 = vmatpush1.bf16.msra.mxu0 0
  %170 = vmatprep.subr.bf16.mxu0 0
  %171 = vmatpush1.bf16.msra.mxu0 0
  %172 = vmatprep.subr.bf16.mxu0 0
  %173 = vmatpush1.bf16.msra.mxu0 0
  %174 = vmatprep.subr.bf16.mxu0 0
  %175 = vmatpush1.bf16.msra.mxu0 0
  %176 = vmatprep.subr.bf16.mxu0 0
  %177 = vmatpush1.bf16.msra.mxu0 0
  %178 = vmatprep.subr.bf16.mxu0 0
  %179 = vmatpush1.bf16.msra.mxu0 0
  %180 = vmatprep.subr.bf16.mxu0 0
  %181 = vmatpush1.bf16.msra.mxu0 0
  %182 = vmatprep.subr.bf16.mxu0 0
  %183 = vmatpush1.bf16.msra.mxu0 0
  %184 = vmatprep.mubr.bf16.mxu0 0
  %185 = vmatmul.mubr.bf16.gmra.mrb[0].mxu0 %v150
  %v186 = vpop.f32.mrb[0].mxu0
  %v187 = vadd.f32 0.0, %v186
  %v188 = vpop.f32.mrb[0].mxu0
  %v189 = vpop.f32.mrb[0].mxu0
  %v190 = vpop.f32.mrb[0].mxu0
  %191 = vdwg.mxu0
  %v192 = vadd.f32 %v102, %v187
  %v193 = vxor.u32 %v192, 2147483648
  %v194 = vmul.f32 %v193, 1.442695
  %v195 = vpow.pop %v194
  %v196 = vadd.f32 %v195, 1.0
  %v197 = vrcp.pop %v196
  %v198 = vmul.f32 1.0, %v197
  %v199 = vtanh.pop %v192
  %v200 = vmul.f32 %v198, 0.0
  %202 = vrot.lane.b32.xlu0 %v199, 64
  %v203 = vpop.permute.xlu0 %202
  %v205 = vmul.f32 %v198, %v203
  %207 = vrot.lane.b32.xlu0 %v205, 32
  %v208 = vpop.permute.xlu0 %207
  %v210 = vadd.f32 %v200, %v208
  %v211 = vtanh.pop %v210
  %213 = vrot.lane.b32.xlu0 %v211, 64
  %v214 = vpop.permute.xlu0 %213
  %v216 = vmul.f32 %v198, %v214
  %v217 = vpack.c.bf16 %v216, %v216
  %219 = vrot.lane.b32.xlu0 %v217, 32
  %v220 = vpop.permute.xlu0 %219
  %v222 = vsel %vm148, %v220, 0
  %224 = vmatprep.subr.bf16.mxu0 0
  %225 = vmatpush1.bf16.msra.mxu0 %v144
  %226 = vmatprep.subr.bf16.mxu0 0
  %227 = vmatpush1.bf16.msra.mxu0 %v145
  %228 = vmatprep.subr.bf16.mxu0 0
  %229 = vmatpush1.bf16.msra.mxu0 0
  %230 = vmatprep.subr.bf16.mxu0 0
  %231 = vmatpush1.bf16.msra.mxu0 0
  %232 = vmatprep.subr.bf16.mxu0 0
  %233 = vmatpush1.bf16.msra.mxu0 0
  %234 = vmatprep.subr.bf16.mxu0 0
  %235 = vmatpush1.bf16.msra.mxu0 0
  %236 = vmatprep.subr.bf16.mxu0 0
  %237 = vmatpush1.bf16.msra.mxu0 0
  %238 = vmatprep.subr.bf16.mxu0 0
  %239 = vmatpush1.bf16.msra.mxu0 0
  %240 = vmatprep.subr.bf16.mxu0 0
  %241 = vmatpush1.bf16.msra.mxu0 0
  %242 = vmatprep.subr.bf16.mxu0 0
  %243 = vmatpush1.bf16.msra.mxu0 0
  %244 = vmatprep.subr.bf16.mxu0 0
  %245 = vmatpush1.bf16.msra.mxu0 0
  %246 = vmatprep.subr.bf16.mxu0 0
  %247 = vmatpush1.bf16.msra.mxu0 0
  %248 = vmatprep.subr.bf16.mxu0 0
  %249 = vmatpush1.bf16.msra.mxu0 0
  %250 = vmatprep.subr.bf16.mxu0 0
  %251 = vmatpush1.bf16.msra.mxu0 0
  %252 = vmatprep.subr.bf16.mxu0 0
  %253 = vmatpush1.bf16.msra.mxu0 0
  %254 = vmatprep.subr.bf16.mxu0 0
  %255 = vmatpush1.bf16.msra.mxu0 0
  %256 = vmatprep.mubr.bf16.mxu0 0
  %257 = vmatmul.mubr.bf16.gmra.mrb[0].mxu0 %v222
  %v258 = vpop.f32.mrb[0].mxu0
  %v259 = vadd.f32 0.0, %v258
  %v260 = vpop.f32.mrb[0].mxu0
  %v261 = vpop.f32.mrb[0].mxu0
  %v262 = vpop.f32.mrb[0].mxu0
  %263 = vdwg.mxu0
  %v264 = vadd.f32 %v105, %v259
  %v265 = vxor.u32 %v264, 2147483648
  %v266 = vmul.f32 %v265, 1.442695
  %v267 = vpow.pop %v266
  %v268 = vadd.f32 %v267, 1.0
  %v269 = vrcp.pop %v268
  %v270 = vmul.f32 1.0, %v269
  %v271 = vtanh.pop %v264
  %v272 = vmul.f32 %v270, %v210
  %274 = vrot.lane.b32.xlu0 %v271, 64
  %v275 = vpop.permute.xlu0 %274
  %v277 = vmul.f32 %v270, %v275
  %279 = vrot.lane.b32.xlu0 %v277, 32
  %v280 = vpop.permute.xlu0 %279
  %v282 = vadd.f32 %v272, %v280
  %v283 = vtanh.pop %v282
  %285 = vrot.lane.b32.xlu0 %v283, 64
  %v286 = vpop.permute.xlu0 %285
  %v288 = vmul.f32 %v270, %v286
  %v289 = vpack.c.bf16 %v288, %v288
  %291 = vrot.lane.b32.xlu0 %v289, 32
  %v292 = vpop.permute.xlu0 %291
  %v294 = vsel %vm148, %v292, 0
  %296 = vmatprep.subr.bf16.mxu0 0
  %297 = vmatpush1.bf16.msra.mxu0 %v144
  %298 = vmatprep.subr.bf16.mxu0 0
  %299 = vmatpush1.bf16.msra.mxu0 %v145
  %300 = vmatprep.subr.bf16.mxu0 0
  %301 = vmatpush1.bf16.msra.mxu0 0
  %302 = vmatprep.subr.bf16.mxu0 0
  %303 = vmatpush1.bf16.msra.mxu0 0
  %304 = vmatprep.subr.bf16.mxu0 0
  %305 = vmatpush1.bf16.msra.mxu0 0
  %306 = vmatprep.subr.bf16.mxu0 0
  %307 = vmatpush1.bf16.msra.mxu0 0
  %308 = vmatprep.subr.bf16.mxu0 0
  %309 = vmatpush1.bf16.msra.mxu0 0
  %310 = vmatprep.subr.bf16.mxu0 0
  %311 = vmatpush1.bf16.msra.mxu0 0
  %312 = vmatprep.subr.bf16.mxu0 0
  %313 = vmatpush1.bf16.msra.mxu0 0
  %314 = vmatprep.subr.bf16.mxu0 0
  %315 = vmatpush1.bf16.msra.mxu0 0
  %316 = vmatprep.subr.bf16.mxu0 0
  %317 = vmatpush1.bf16.msra.mxu0 0
  %318 = vmatprep.subr.bf16.mxu0 0
  %319 = vmatpush1.bf16.msra.mxu0 0
  %320 = vmatprep.subr.bf16.mxu0 0
  %321 = vmatpush1.bf16.msra.mxu0 0
  %322 = vmatprep.subr.bf16.mxu0 0
  %323 = vmatpush1.bf16.msra.mxu0 0
  %324 = vmatprep.subr.bf16.mxu0 0
  %325 = vmatpush1.bf16.msra.mxu0 0
  %326 = vmatprep.subr.bf16.mxu0 0
  %327 = vmatpush1.bf16.msra.mxu0 0
  %328 = vmatprep.mubr.bf16.mxu0 0
  %329 = vmatmul.mubr.bf16.gmra.mrb[0].mxu0 %v294
  %v330 = vpop.f32.mrb[0].mxu0
  %v331 = vadd.f32 0.0, %v330
  %v332 = vpop.f32.mrb[0].mxu0
  %v333 = vpop.f32.mrb[0].mxu0
  %v334 = vpop.f32.mrb[0].mxu0
  %335 = vdwg.mxu0
  %v336 = vadd.f32 %v110, %v331
  %v337 = vxor.u32 %v336, 2147483648
  %v338 = vmul.f32 %v337, 1.442695
  %v339 = vpow.pop %v338
  %v340 = vadd.f32 %v339, 1.0
  %v341 = vrcp.pop %v340
  %v342 = vmul.f32 1.0, %v341
  %v343 = vtanh.pop %v336
  %v344 = vmul.f32 %v342, %v282
  %346 = vrot.lane.b32.xlu0 %v343, 64
  %v347 = vpop.permute.xlu0 %346
  %v349 = vmul.f32 %v342, %v347
  %351 = vrot.lane.b32.xlu0 %v349, 32
  %v352 = vpop.permute.xlu0 %351
  %v354 = vadd.f32 %v344, %v352
  %v355 = vtanh.pop %v354
  %357 = vrot.lane.b32.xlu0 %v355, 64
  %v358 = vpop.permute.xlu0 %357
  %v360 = vmul.f32 %v342, %v358
  %v361 = vpack.c.bf16 %v360, %v360
  %363 = vrot.lane.b32.xlu0 %v361, 32
  %v364 = vpop.permute.xlu0 %363
  %v366 = vsel %vm148, %v364, 0
  %368 = vmatprep.subr.bf16.mxu0 0
  %369 = vmatpush1.bf16.msra.mxu0 %v144
  %370 = vmatprep.subr.bf16.mxu0 0
  %371 = vmatpush1.bf16.msra.mxu0 %v145
  %372 = vmatprep.subr.bf16.mxu0 0
  %373 = vmatpush1.bf16.msra.mxu0 0
  %374 = vmatprep.subr.bf16.mxu0 0
  %375 = vmatpush1.bf16.msra.mxu0 0
  %376 = vmatprep.subr.bf16.mxu0 0
  %377 = vmatpush1.bf16.msra.mxu0 0
  %378 = vmatprep.subr.bf16.mxu0 0
  %379 = vmatpush1.bf16.msra.mxu0 0
  %380 = vmatprep.subr.bf16.mxu0 0
  %381 = vmatpush1.bf16.msra.mxu0 0
  %382 = vmatprep.subr.bf16.mxu0 0
  %383 = vmatpush1.bf16.msra.mxu0 0
  %384 = vmatprep.subr.bf16.mxu0 0
  %385 = vmatpush1.bf16.msra.mxu0 0
  %386 = vmatprep.subr.bf16.mxu0 0
  %387 = vmatpush1.bf16.msra.mxu0 0
  %388 = vmatprep.subr.bf16.mxu0 0
  %389 = vmatpush1.bf16.msra.mxu0 0
  %390 = vmatprep.subr.bf16.mxu0 0
  %391 = vmatpush1.bf16.msra.mxu0 0
  %392 = vmatprep.subr.bf16.mxu0 0
  %393 = vmatpush1.bf16.msra.mxu0 0
  %394 = vmatprep.subr.bf16.mxu0 0
  %395 = vmatpush1.bf16.msra.mxu0 0
  %396 = vmatprep.subr.bf16.mxu0 0
  %397 = vmatpush1.bf16.msra.mxu0 0
  %398 = vmatprep.subr.bf16.mxu0 0
  %399 = vmatpush1.bf16.msra.mxu0 0
  %400 = vmatprep.mubr.bf16.mxu0 0
  %401 = vmatmul.mubr.bf16.gmra.mrb[0].mxu0 %v366
  %v402 = vpop.f32.mrb[0].mxu0
  %v403 = vadd.f32 0.0, %v402
  %v404 = vpop.f32.mrb[0].mxu0
  %v405 = vpop.f32.mrb[0].mxu0
  %v406 = vpop.f32.mrb[0].mxu0
  %407 = vdwg.mxu0
  %v408 = vadd.f32 %v113, %v403
  %v409 = vxor.u32 %v408, 2147483648
  %v410 = vmul.f32 %v409, 1.442695
  %v411 = vpow.pop %v410
  %v412 = vadd.f32 %v411, 1.0
  %v413 = vrcp.pop %v412
  %v414 = vmul.f32 1.0, %v413
  %v415 = vtanh.pop %v408
  %v416 = vmul.f32 %v414, %v354
  %418 = vrot.lane.b32.xlu0 %v415, 64
  %v419 = vpop.permute.xlu0 %418
  %v421 = vmul.f32 %v414, %v419
  %423 = vrot.lane.b32.xlu0 %v421, 32
  %v424 = vpop.permute.xlu0 %423
  %v426 = vadd.f32 %v416, %v424
  %v427 = vtanh.pop %v426
  %429 = vrot.lane.b32.xlu0 %v427, 64
  %v430 = vpop.permute.xlu0 %429
  %v432 = vmul.f32 %v414, %v430
  %v433 = vpack.c.bf16 %v432, %v432
  %435 = vrot.lane.b32.xlu0 %v433, 32
  %v436 = vpop.permute.xlu0 %435
  %v438 = vsel %vm148, %v436, 0
  %440 = vmatprep.subr.bf16.mxu0 0
  %441 = vmatpush1.bf16.msra.mxu0 %v144
  %442 = vmatprep.subr.bf16.mxu0 0
  %443 = vmatpush1.bf16.msra.mxu0 %v145
  %444 = vmatprep.subr.bf16.mxu0 0
  %445 = vmatpush1.bf16.msra.mxu0 0
  %446 = vmatprep.subr.bf16.mxu0 0
  %447 = vmatpush1.bf16.msra.mxu0 0
  %448 = vmatprep.subr.bf16.mxu0 0
  %449 = vmatpush1.bf16.msra.mxu0 0
  %450 = vmatprep.subr.bf16.mxu0 0
  %451 = vmatpush1.bf16.msra.mxu0 0
  %452 = vmatprep.subr.bf16.mxu0 0
  %453 = vmatpush1.bf16.msra.mxu0 0
  %454 = vmatprep.subr.bf16.mxu0 0
  %455 = vmatpush1.bf16.msra.mxu0 0
  %456 = vmatprep.subr.bf16.mxu0 0
  %457 = vmatpush1.bf16.msra.mxu0 0
  %458 = vmatprep.subr.bf16.mxu0 0
  %459 = vmatpush1.bf16.msra.mxu0 0
  %460 = vmatprep.subr.bf16.mxu0 0
  %461 = vmatpush1.bf16.msra.mxu0 0
  %462 = vmatprep.subr.bf16.mxu0 0
  %463 = vmatpush1.bf16.msra.mxu0 0
  %464 = vmatprep.subr.bf16.mxu0 0
  %465 = vmatpush1.bf16.msra.mxu0 0
  %466 = vmatprep.subr.bf16.mxu0 0
  %467 = vmatpush1.bf16.msra.mxu0 0
  %468 = vmatprep.subr.bf16.mxu0 0
  %469 = vmatpush1.bf16.msra.mxu0 0
  %470 = vmatprep.subr.bf16.mxu0 0
  %471 = vmatpush1.bf16.msra.mxu0 0
  %472 = vmatprep.mubr.bf16.mxu0 0
  %473 = vmatmul.mubr.bf16.gmra.mrb[0].mxu0 %v438
  %v474 = vpop.f32.mrb[0].mxu0
  %v475 = vadd.f32 0.0, %v474
  %v476 = vpop.f32.mrb[0].mxu0
  %v477 = vpop.f32.mrb[0].mxu0
  %v478 = vpop.f32.mrb[0].mxu0
  %479 = vdwg.mxu0
  %v480 = vadd.f32 %v118, %v475
  %v481 = vxor.u32 %v480, 2147483648
  %v482 = vmul.f32 %v481, 1.442695
  %v483 = vpow.pop %v482
  %v484 = vadd.f32 %v483, 1.0
  %v485 = vrcp.pop %v484
  %v486 = vmul.f32 1.0, %v485
  %v487 = vtanh.pop %v480
  %v488 = vmul.f32 %v486, %v426
  %490 = vrot.lane.b32.xlu0 %v487, 64
  %v491 = vpop.permute.xlu0 %490
  %v493 = vmul.f32 %v486, %v491
  %495 = vrot.lane.b32.xlu0 %v493, 32
  %v496 = vpop.permute.xlu0 %495
  %v498 = vadd.f32 %v488, %v496
  %v499 = vtanh.pop %v498
  %501 = vrot.lane.b32.xlu0 %v499, 64
  %v502 = vpop.permute.xlu0 %501
  %v504 = vmul.f32 %v486, %v502
  %v505 = vpack.c.bf16 %v504, %v504
  %507 = vrot.lane.b32.xlu0 %v505, 32
  %v508 = vpop.permute.xlu0 %507
  %v510 = vsel %vm148, %v508, 0
  %512 = vmatprep.subr.bf16.mxu0 0
  %513 = vmatpush1.bf16.msra.mxu0 %v144
  %514 = vmatprep.subr.bf16.mxu0 0
  %515 = vmatpush1.bf16.msra.mxu0 %v145
  %516 = vmatprep.subr.bf16.mxu0 0
  %517 = vmatpush1.bf16.msra.mxu0 0
  %518 = vmatprep.subr.bf16.mxu0 0
  %519 = vmatpush1.bf16.msra.mxu0 0
  %520 = vmatprep.subr.bf16.mxu0 0
  %521 = vmatpush1.bf16.msra.mxu0 0
  %522 = vmatprep.subr.bf16.mxu0 0
  %523 = vmatpush1.bf16.msra.mxu0 0
  %524 = vmatprep.subr.bf16.mxu0 0
  %525 = vmatpush1.bf16.msra.mxu0 0
  %526 = vmatprep.subr.bf16.mxu0 0
  %527 = vmatpush1.bf16.msra.mxu0 0
  %528 = vmatprep.subr.bf16.mxu0 0
  %529 = vmatpush1.bf16.msra.mxu0 0
  %530 = vmatprep.subr.bf16.mxu0 0
  %531 = vmatpush1.bf16.msra.mxu0 0
  %532 = vmatprep.subr.bf16.mxu0 0
  %533 = vmatpush1.bf16.msra.mxu0 0
  %534 = vmatprep.subr.bf16.mxu0 0
  %535 = vmatpush1.bf16.msra.mxu0 0
  %536 = vmatprep.subr.bf16.mxu0 0
  %537 = vmatpush1.bf16.msra.mxu0 0
  %538 = vmatprep.subr.bf16.mxu0 0
  %539 = vmatpush1.bf16.msra.mxu0 0
  %540 = vmatprep.subr.bf16.mxu0 0
  %541 = vmatpush1.bf16.msra.mxu0 0
  %542 = vmatprep.subr.bf16.mxu0 0
  %543 = vmatpush1.bf16.msra.mxu0 0
  %544 = vmatprep.mubr.bf16.mxu0 0
  %545 = vmatmul.mubr.bf16.gmra.mrb[0].mxu0 %v510
  %v546 = vpop.f32.mrb[0].mxu0
  %v547 = vadd.f32 0.0, %v546
  %v548 = vpop.f32.mrb[0].mxu0
  %v549 = vpop.f32.mrb[0].mxu0
  %v550 = vpop.f32.mrb[0].mxu0
  %551 = vdwg.mxu0
  %v552 = vadd.f32 %v121, %v547
  %v553 = vxor.u32 %v552, 2147483648
  %v554 = vmul.f32 %v553, 1.442695
  %v555 = vpow.pop %v554
  %v556 = vadd.f32 %v555, 1.0
  %v557 = vrcp.pop %v556
  %v558 = vmul.f32 1.0, %v557
  %v559 = vtanh.pop %v552
  %v560 = vmul.f32 %v558, %v498
  %562 = vrot.lane.b32.xlu0 %v559, 64
  %v563 = vpop.permute.xlu0 %562
  %v565 = vmul.f32 %v558, %v563
  %567 = vrot.lane.b32.xlu0 %v565, 32
  %v568 = vpop.permute.xlu0 %567
  %v570 = vadd.f32 %v560, %v568
  %v571 = vtanh.pop %v570
  %573 = vrot.lane.b32.xlu0 %v571, 64
  %v574 = vpop.permute.xlu0 %573
  %v576 = vmul.f32 %v558, %v574
  %v577 = vpack.c.bf16 %v576, %v576
  %579 = vrot.lane.b32.xlu0 %v577, 32
  %v580 = vpop.permute.xlu0 %579
  %v582 = vsel %vm148, %v580, 0
  %584 = vmatprep.subr.bf16.mxu0 0
  %585 = vmatpush1.bf16.msra.mxu0 %v144
  %586 = vmatprep.subr.bf16.mxu0 0
  %587 = vmatpush1.bf16.msra.mxu0 %v145
  %588 = vmatprep.subr.bf16.mxu0 0
  %589 = vmatpush1.bf16.msra.mxu0 0
  %590 = vmatprep.subr.bf16.mxu0 0
  %591 = vmatpush1.bf16.msra.mxu0 0
  %592 = vmatprep.subr.bf16.mxu0 0
  %593 = vmatpush1.bf16.msra.mxu0 0
  %594 = vmatprep.subr.bf16.mxu0 0
  %595 = vmatpush1.bf16.msra.mxu0 0
  %596 = vmatprep.subr.bf16.mxu0 0
  %597 = vmatpush1.bf16.msra.mxu0 0
  %598 = vmatprep.subr.bf16.mxu0 0
  %599 = vmatpush1.bf16.msra.mxu0 0
  %600 = vmatprep.subr.bf16.mxu0 0
  %601 = vmatpush1.bf16.msra.mxu0 0
  %602 = vmatprep.subr.bf16.mxu0 0
  %603 = vmatpush1.bf16.msra.mxu0 0
  %604 = vmatprep.subr.bf16.mxu0 0
  %605 = vmatpush1.bf16.msra.mxu0 0
  %606 = vmatprep.subr.bf16.mxu0 0
  %607 = vmatpush1.bf16.msra.mxu0 0
  %608 = vmatprep.subr.bf16.mxu0 0
  %609 = vmatpush1.bf16.msra.mxu0 0
  %610 = vmatprep.subr.bf16.mxu0 0
  %611 = vmatpush1.bf16.msra.mxu0 0
  %612 = vmatprep.subr.bf16.mxu0 0
  %613 = vmatpush1.bf16.msra.mxu0 0
  %614 = vmatprep.subr.bf16.mxu0 0
  %615 = vmatpush1.bf16.msra.mxu0 0
  %616 = vmatprep.mubr.bf16.mxu0 0
  %617 = vmatmul.mubr.bf16.gmra.mrb[0].mxu0 %v582
  %v618 = vpop.f32.mrb[0].mxu0
  %v619 = vadd.f32 0.0, %v618
  %v620 = vpop.f32.mrb[0].mxu0
  %v621 = vpop.f32.mrb[0].mxu0
  %v622 = vpop.f32.mrb[0].mxu0
  %623 = vdwg.mxu0
  %v624 = vadd.f32 %v126, %v619
  %v625 = vxor.u32 %v624, 2147483648
  %v626 = vmul.f32 %v625, 1.442695
  %v627 = vpow.pop %v626
  %v628 = vadd.f32 %v627, 1.0
  %v629 = vrcp.pop %v628
  %v630 = vmul.f32 1.0, %v629
  %v631 = vtanh.pop %v624
  %v632 = vmul.f32 %v630, %v570
  %634 = vrot.lane.b32.xlu0 %v631, 64
  %v635 = vpop.permute.xlu0 %634
  %v637 = vmul.f32 %v630, %v635
  %639 = vrot.lane.b32.xlu0 %v637, 32
  %v640 = vpop.permute.xlu0 %639
  %v642 = vadd.f32 %v632, %v640
  %v643 = vtanh.pop %v642
  %645 = vrot.lane.b32.xlu0 %v643, 64
  %v646 = vpop.permute.xlu0 %645
  %v648 = vmul.f32 %v630, %v646
  %v649 = vpack.c.bf16 %v648, %v648
  %651 = vrot.lane.b32.xlu0 %v649, 32
  %v652 = vpop.permute.xlu0 %651
  %v654 = vsel %vm148, %v652, 0
  %656 = vmatprep.subr.bf16.mxu0 0
  %657 = vmatpush1.bf16.msra.mxu0 %v144
  %658 = vmatprep.subr.bf16.mxu0 0
  %659 = vmatpush1.bf16.msra.mxu0 %v145
  %660 = vmatprep.subr.bf16.mxu0 0
  %661 = vmatpush1.bf16.msra.mxu0 0
  %662 = vmatprep.subr.bf16.mxu0 0
  %663 = vmatpush1.bf16.msra.mxu0 0
  %664 = vmatprep.subr.bf16.mxu0 0
  %665 = vmatpush1.bf16.msra.mxu0 0
  %666 = vmatprep.subr.bf16.mxu0 0
  %667 = vmatpush1.bf16.msra.mxu0 0
  %668 = vmatprep.subr.bf16.mxu0 0
  %669 = vmatpush1.bf16.msra.mxu0 0
  %670 = vmatprep.subr.bf16.mxu0 0
  %671 = vmatpush1.bf16.msra.mxu0 0
  %672 = vmatprep.subr.bf16.mxu0 0
  %673 = vmatpush1.bf16.msra.mxu0 0
  %674 = vmatprep.subr.bf16.mxu0 0
  %675 = vmatpush1.bf16.msra.mxu0 0
  %676 = vmatprep.subr.bf16.mxu0 0
  %677 = vmatpush1.bf16.msra.mxu0 0
  %678 = vmatprep.subr.bf16.mxu0 0
  %679 = vmatpush1.bf16.msra.mxu0 0
  %680 = vmatprep.subr.bf16.mxu0 0
  %681 = vmatpush1.bf16.msra.mxu0 0
  %682 = vmatprep.subr.bf16.mxu0 0
  %683 = vmatpush1.bf16.msra.mxu0 0
  %684 = vmatprep.subr.bf16.mxu0 0
  %685 = vmatpush1.bf16.msra.mxu0 0
  %686 = vmatprep.subr.bf16.mxu0 0
  %687 = vmatpush1.bf16.msra.mxu0 0
  %688 = vmatprep.mubr.bf16.mxu0 0
  %689 = vmatmul.mubr.bf16.gmra.mrb[0].mxu0 %v654
  %v690 = vpop.f32.mrb[0].mxu0
  %v691 = vadd.f32 0.0, %v690
  %v692 = vpop.f32.mrb[0].mxu0
  %v693 = vpop.f32.mrb[0].mxu0
  %v694 = vpop.f32.mrb[0].mxu0
  %695 = vdwg.mxu0
  %v696 = vadd.f32 %v129, %v691
  %v697 = vxor.u32 %v696, 2147483648
  %v698 = vmul.f32 %v697, 1.442695
  %v699 = vpow.pop %v698
  %v700 = vadd.f32 %v699, 1.0
  %v701 = vrcp.pop %v700
  %v702 = vmul.f32 1.0, %v701
  %v703 = vtanh.pop %v696
  %v704 = vmul.f32 %v702, %v642
  %706 = vrot.lane.b32.xlu0 %v703, 64
  %v707 = vpop.permute.xlu0 %706
  %v709 = vmul.f32 %v702, %v707
  %711 = vrot.lane.b32.xlu0 %v709, 32
  %v712 = vpop.permute.xlu0 %711
  %v714 = vadd.f32 %v704, %v712
  %v715 = vtanh.pop %v714
  %717 = vrot.lane.b32.xlu0 %v715, 64
  %v718 = vpop.permute.xlu0 %717
  %v720 = vmul.f32 %v702, %v718
  %v721 = vpack.c.bf16 %v720, %v720
  %v722 = vld [vmem:[%s4] sm:$0xf]
  %v723 = vld [vmem:[%s4 + $0x4] sm:$0xf]
  %v724 = vld [vmem:[%s4 + $0x8] sm:$0xf]
  %v725 = vld [vmem:[%s4 + $0xc] sm:$0xf]
  %v726 = vld [vmem:[%s5] sm:$0x1]
  %v728 = vlaneseq
  %v729 = vshrl.u32 %v728, 7
  %v730 = vsub.s32 0, %v729
  %v731 = vrot.slane %v726, %v730
  %734 = vrot.lane.b32.xlu0 %v721, 32
  %v735 = vpop.permute.xlu0 %734
  %v740 = vunpack.c.l.b16 %v722
  %v741 = vunpack.c.l.b16 %v723
  %v742 = vunpack.c.l.b16 %v724
  %v743 = vunpack.c.l.b16 %v725
  %v744 = vpack.c.b16 %v741, %v740
  %v745 = vpack.c.b16 %v743, %v742
  %v749 = vsel %vm148, %v735, 0
  %751 = vmatprep.subr.bf16.mxu0 0
  %752 = vmatpush1.bf16.msra.mxu0 %v744
  %753 = vmatprep.subr.bf16.mxu0 0
  %754 = vmatpush1.bf16.msra.mxu0 %v745
  %755 = vmatprep.subr.bf16.mxu0 0
  %756 = vmatpush1.bf16.msra.mxu0 0
  %757 = vmatprep.subr.bf16.mxu0 0
  %758 = vmatpush1.bf16.msra.mxu0 0
  %759 = vmatprep.subr.bf16.mxu0 0
  %760 = vmatpush1.bf16.msra.mxu0 0
  %761 = vmatprep.subr.bf16.mxu0 0
  %762 = vmatpush1.bf16.msra.mxu0 0
  %763 = vmatprep.subr.bf16.mxu0 0
  %764 = vmatpush1.bf16.msra.mxu0 0
  %765 = vmatprep.subr.bf16.mxu0 0
  %766 = vmatpush1.bf16.msra.mxu0 0
  %767 = vmatprep.subr.bf16.mxu0 0
  %768 = vmatpush1.bf16.msra.mxu0 0
  %769 = vmatprep.subr.bf16.mxu0 0
  %770 = vmatpush1.bf16.msra.mxu0 0
  %771 = vmatprep.subr.bf16.mxu0 0
  %772 = vmatpush1.bf16.msra.mxu0 0
  %773 = vmatprep.subr.bf16.mxu0 0
  %774 = vmatpush1.bf16.msra.mxu0 0
  %775 = vmatprep.subr.bf16.mxu0 0
  %776 = vmatpush1.bf16.msra.mxu0 0
  %777 = vmatprep.subr.bf16.mxu0 0
  %778 = vmatpush1.bf16.msra.mxu0 0
  %779 = vmatprep.subr.bf16.mxu0 0
  %780 = vmatpush1.bf16.msra.mxu0 0
  %781 = vmatprep.subr.bf16.mxu0 0
  %782 = vmatpush1.bf16.msra.mxu0 0
  %783 = vmatprep.mubr.bf16.mxu0 0
  %784 = vmatmul.mubr.bf16.gmra.mrb[0].mxu0 %v749
  %v785 = vpop.f32.mrb[0].mxu0
  %v786 = vadd.f32 %v731, %v785
  %v787 = vpop.f32.mrb[0].mxu0
  %v788 = vpop.f32.mrb[0].mxu0
  %v789 = vpop.f32.mrb[0].mxu0
  %790 = vdwg.mxu0
  %v791 = vmax.f32 %v786, 0.0
  %v792 = vpack.c.bf16 %v791, %v791
  %v793 = vld [vmem:[%s6] sm:$0xf]
  %v794 = vld [vmem:[%s6 + $0x4] sm:$0xf]
  %v795 = vld [vmem:[%s6 + $0x8] sm:$0xf]
  %v796 = vld [vmem:[%s6 + $0xc] sm:$0xf]
  %v797 = vld [vmem:[%s6 + $0x10] sm:$0xf]
  %v798 = vld [vmem:[%s6 + $0x14] sm:$0xf]
  %v799 = vld [vmem:[%s6 + $0x18] sm:$0xf]
  %v800 = vld [vmem:[%s6 + $0x1c] sm:$0xf]
  %v801 = vld [vmem:[%s6 + $0x20] sm:$0xf]
  %v802 = vld [vmem:[%s6 + $0x24] sm:$0xf]
  %v803 = vld [vmem:[%s6 + $0x28] sm:$0xf]
  %v804 = vld [vmem:[%s6 + $0x2c] sm:$0xf]
  %v805 = vld [vmem:[%s6 + $0x30] sm:$0xf]
  %v806 = vld [vmem:[%s6 + $0x34] sm:$0xf]
  %v807 = vld [vmem:[%s6 + $0x38] sm:$0xf]
  %v808 = vld [vmem:[%s6 + $0x3c] sm:$0xf]
  %v809 = vld [vmem:[%s7] sm:$0x1]
  %v811 = vlaneseq
  %v812 = vshrl.u32 %v811, 7
  %v813 = vsub.s32 0, %v812
  %v814 = vrot.slane %v809, %v813
  %v832 = vunpack.c.l.b16 %v793
  %v833 = vunpack.c.l.b16 %v794
  %v834 = vunpack.c.l.b16 %v795
  %v835 = vunpack.c.l.b16 %v796
  %v836 = vunpack.c.l.b16 %v797
  %v837 = vunpack.c.l.b16 %v798
  %v838 = vunpack.c.l.b16 %v799
  %v839 = vunpack.c.l.b16 %v800
  %v840 = vunpack.c.l.b16 %v801
  %v841 = vunpack.c.l.b16 %v802
  %v842 = vunpack.c.l.b16 %v803
  %v843 = vunpack.c.l.b16 %v804
  %v844 = vunpack.c.l.b16 %v805
  %v845 = vunpack.c.l.b16 %v806
  %v846 = vunpack.c.l.b16 %v807
  %v847 = vunpack.c.l.b16 %v808
  %v848 = vpack.c.b16 %v833, %v832
  %v849 = vpack.c.b16 %v835, %v834
  %v850 = vpack.c.b16 %v837, %v836
  %v851 = vpack.c.b16 %v839, %v838
  %v852 = vpack.c.b16 %v841, %v840
  %v853 = vpack.c.b16 %v843, %v842
  %v854 = vpack.c.b16 %v845, %v844
  %v855 = vpack.c.b16 %v847, %v846
  %864 = vmatprep.subr.bf16.mxu0 0
  %865 = vmatpush1.bf16.msra.mxu0 %v848
  %866 = vmatprep.subr.bf16.mxu0 0
  %867 = vmatpush1.bf16.msra.mxu0 %v849
  %868 = vmatprep.subr.bf16.mxu0 0
  %869 = vmatpush1.bf16.msra.mxu0 %v850
  %870 = vmatprep.subr.bf16.mxu0 0
  %871 = vmatpush1.bf16.msra.mxu0 %v851
  %872 = vmatprep.subr.bf16.mxu0 0
  %873 = vmatpush1.bf16.msra.mxu0 %v852
  %874 = vmatprep.subr.bf16.mxu0 0
  %875 = vmatpush1.bf16.msra.mxu0 %v853
  %876 = vmatprep.subr.bf16.mxu0 0
  %877 = vmatpush1.bf16.msra.mxu0 %v854
  %878 = vmatprep.subr.bf16.mxu0 0
  %879 = vmatpush1.bf16.msra.mxu0 %v855
  %880 = vmatprep.subr.bf16.mxu0 0
  %881 = vmatpush1.bf16.msra.mxu0 0
  %882 = vmatprep.subr.bf16.mxu0 0
  %883 = vmatpush1.bf16.msra.mxu0 0
  %884 = vmatprep.subr.bf16.mxu0 0
  %885 = vmatpush1.bf16.msra.mxu0 0
  %886 = vmatprep.subr.bf16.mxu0 0
  %887 = vmatpush1.bf16.msra.mxu0 0
  %888 = vmatprep.subr.bf16.mxu0 0
  %889 = vmatpush1.bf16.msra.mxu0 0
  %890 = vmatprep.subr.bf16.mxu0 0
  %891 = vmatpush1.bf16.msra.mxu0 0
  %892 = vmatprep.subr.bf16.mxu0 0
  %893 = vmatpush1.bf16.msra.mxu0 0
  %894 = vmatprep.subr.bf16.mxu0 0
  %895 = vmatpush1.bf16.msra.mxu0 0
  %896 = vmatprep.mubr.bf16.mxu0 0
  %897 = vmatmul.mubr.bf16.gmra.mrb[0].mxu0 %v792
  %v898 = vpop.f32.mrb[0].mxu0
  %v899 = vadd.f32 %v814, %v898
  %v900 = vpop.f32.mrb[0].mxu0
  %v901 = vpop.f32.mrb[0].mxu0
  %v902 = vpop.f32.mrb[0].mxu0
  %903 = vdwg.mxu0
  %904 = vst [vmem:[%s8] sm:$0xff] %v899
  // Predicated region
  $region34: #{autoencoder_forward.1} parent=0 // pred_check
    _
  $region35: #{autoencoder_forward.1} parent=0 // pred_check_branch
    %906 = sbr.rel (0) target = $region37
  $region36: #{autoencoder_forward.1} parent=0 // pred_region
    _
  $region37: #{autoencoder_forward.1} parent=0 // pred_fallthru
    _
  // Predicated region
  $region38: #{autoencoder_forward.1} parent=0 // pred_check
    _
  $region39: #{autoencoder_forward.1} parent=0 // pred_check_branch
    %908 = sbr.rel (0) target = $region41
  $region40: #{autoencoder_forward.1} parent=0 // pred_region
    _
  $region41: #{autoencoder_forward.1} parent=0 // pred_fallthru
    _

</llo_original>
